<compile_context>
chip_gen: v5e
topology: v5e:2x2
jax: 0.10.0
libtpu: 0.0.40
codegen_flags: <defaults>
</compile_context>

<pallas_src>
import jax
import jax.numpy as jnp
from jax.experimental import pallas as pl
from jax.experimental.pallas import tpu as pltpu

_LANES = 512          # lane-dense last axis (multiple of 128)
_SUBLANE_ALIGN = 16   # safe sublane multiple for f32 and packed bf16 tiles


def _h_sigmoid_kernel(x_ref, o_ref):
    x = x_ref[...]
    # ReLU6(x + 3) / 6  ==  clamp(x + 3, 0, 6) * (1/6)   (pure VPU work)
    o_ref[...] = (jnp.clip(x + 3.0, 0.0, 6.0) * (1.0 / 6.0)).astype(o_ref.dtype)


def _round_up(a: int, b: int) -> int:
    return ((a + b - 1) // b) * b


def _pick_block_rows(rows: int):
    """Choose block rows (and optional vmem limit) for the (rows, 512) slab."""
    # v5e: keep 1024-row (2 MiB) blocks under its 16 MiB scoped VMEM default.
    # v6e / v7x: 2048-row (4 MiB) blocks; 16 MiB double-buffered in+out, with
    # an explicit vmem limit for headroom.
    max_rows, vmem_limit = 1024, None
    try:
        kind = jax.devices()[0].device_kind.lower()
        if ("v6" in kind) or ("v7" in kind) or ("7x" in kind):
            max_rows, vmem_limit = 2048, 32 * 1024 * 1024
    except Exception:
        pass

    if rows <= _SUBLANE_ALIGN:
        # Tiny input: single block whose shape equals the full array shape.
        return rows, None

    # Aim for >=2 grid steps (megacore sharding on v7x), sublane-aligned,
    # capped at the per-generation maximum block size.
    block_rows = min(max_rows, _round_up(pl.cdiv(rows, 2), _SUBLANE_ALIGN))
    if block_rows < max_rows:
        vmem_limit = None
    return block_rows, vmem_limit


def h_sigmoid(x: jax.Array) -> jax.Array:
    """Elementwise hard-sigmoid, semantics identical to the PyTorch module."""
    orig_shape = x.shape
    orig_dtype = x.dtype
    n = x.size
    if n == 0:
        return x

    flat = x.reshape(-1)

    # Only pad when the flat size is not lane-divisible, and then only to the
    # minimum 16x512-element granularity (no full-block rounding).
    needs_pad = (n % _LANES) != 0
    if needs_pad:
        total = _round_up(n, _SUBLANE_ALIGN * _LANES)
        flat = jnp.pad(flat, (0, total - n))
    else:
        total = n

    rows = total // _LANES
    x2d = flat.reshape(rows, _LANES)

    block_rows, vmem_limit = _pick_block_rows(rows)
    grid = (pl.cdiv(rows, block_rows),)   # ragged last block masked by Pallas

    compiler_kwargs = {"dimension_semantics": ("parallel",)}
    if vmem_limit is not None:
        compiler_kwargs["vmem_limit_bytes"] = vmem_limit

    call_kwargs = {}
    if needs_pad:
        # The padded temp is a fresh buffer -> safe to alias with the output;
        # cuts peak HBM footprint (does not change bandwidth).
        call_kwargs["input_output_aliases"] = {0: 0}

    out = pl.pallas_call(
        _h_sigmoid_kernel,
        out_shape=jax.ShapeDtypeStruct((rows, _LANES), orig_dtype),
        grid_spec=pltpu.PrefetchScalarGridSpec(
            num_scalar_prefetch=0,
            grid=grid,
            in_specs=[pl.BlockSpec((block_rows, _LANES), lambda i: (i, 0))],
            out_specs=pl.BlockSpec((block_rows, _LANES), lambda i: (i, 0)),
        ),
        compiler_params=pltpu.CompilerParams(**compiler_kwargs),
        **call_kwargs,
    )(x2d)

    if needs_pad:
        return out.reshape(-1)[:n].reshape(orig_shape)
    return out.reshape(orig_shape)


# TODO(synk): if h_sigmoid feeds an adjacent op (e.g. h_swish = x * h_sigmoid(x)
# or a conv epilogue), fuse it into that kernel — standalone it is HBM-roofline
# bound and cannot be made faster in isolation.


if __name__ == "__main__":
    key = jax.random.PRNGKey(0)

    # NCHW input, same convention as the PyTorch module (lane-divisible size).
    x = jax.random.normal(key, (2, 4, 16, 16), dtype=jnp.float32) * 4.0
    y = jax.block_until_ready(h_sigmoid(x))
    y_ref = jnp.clip(x + 3.0, 0.0, 6.0) / 6.0
    assert y.shape == x.shape and y.dtype == x.dtype
    assert jnp.allclose(y, y_ref, atol=1e-6), "mismatch vs reference (no-pad path)"

    # Odd-sized input to exercise the gated pad + ragged-block path.
    x2 = jax.random.normal(jax.random.PRNGKey(1), (3, 5, 7, 9), dtype=jnp.float32) * 4.0
    y2 = jax.block_until_ready(h_sigmoid(x2))
    y2_ref = jnp.clip(x2 + 3.0, 0.0, 6.0) / 6.0
    assert y2.shape == x2.shape and y2.dtype == x2.dtype
    assert jnp.allclose(y2, y2_ref, atol=1e-6), "mismatch vs reference (pad path)"

    print("KERNEL_OK")
</pallas_src>

<mosaic_0001>
module attributes {stable_mosaic.version = 11 : i64} {
  func.func @_h_sigmoid_kernel(%arg0: i32, %arg1: memref<4x512xf32, #tpu.memory_space<vmem>>, %arg2: memref<4x512xf32, #tpu.memory_space<vmem>>) attributes {dimension_semantics = [#tpu.dimension_semantics<parallel>], iteration_bounds = array<i64: 1>, scalar_prefetch = 0 : i64, scratch_operands = 0 : i64, tpu.core_type = #tpu.core_type<tc>, window_params = [{transform_indices = @transform_0, window_bounds = array<i64: 4, 512>}, {transform_indices = @transform_1, window_bounds = array<i64: 4, 512>}]} {
    %c0 = arith.constant 0 : index
    %c0_0 = arith.constant 0 : index
    %0 = vector.load %arg1[%c0, %c0_0] : memref<4x512xf32, #tpu.memory_space<vmem>>, vector<4x512xf32>
    %cst = arith.constant 3.000000e+00 : f32
    %1 = vector.broadcast %cst : f32 to vector<4x512xf32>
    %2 = arith.addf %0, %1 : vector<4x512xf32>
    %cst_1 = arith.constant 0.000000e+00 : f32
    %cst_2 = arith.constant 6.000000e+00 : f32
    %3 = vector.broadcast %cst_1 : f32 to vector<4x512xf32>
    %4 = arith.maximumf %3, %2 : vector<4x512xf32>
    %5 = vector.broadcast %cst_2 : f32 to vector<4x512xf32>
    %6 = arith.minimumf %5, %4 : vector<4x512xf32>
    %cst_3 = arith.constant 0.166666672 : f32
    %7 = vector.broadcast %cst_3 : f32 to vector<4x512xf32>
    %8 = arith.mulf %6, %7 : vector<4x512xf32>
    %c0_4 = arith.constant 0 : index
    %c0_5 = arith.constant 0 : index
    %9 = vector.load %arg2[%c0_4, %c0_5] : memref<4x512xf32, #tpu.memory_space<vmem>>, vector<4x512xf32>
    tpu.vector_store %arg2[%c0_4, %c0_5], %8 {strides = array<i32>} : memref<4x512xf32, #tpu.memory_space<vmem>>, vector<4x512xf32>,
    return
  }
  func.func @transform_0(%arg0: i32) -> (i32, i32) {
    %c0_i32 = arith.constant 0 : i32
    %c0_i32_0 = arith.constant 0 : i32
    return %arg0, %c0_i32 : i32, i32
  }
  func.func @transform_1(%arg0: i32) -> (i32, i32) {
    %c0_i32 = arith.constant 0 : i32
    %c0_i32_0 = arith.constant 0 : i32
    return %arg0, %c0_i32 : i32, i32
  }
}

</mosaic_0001>

<llo_original>
// kernel: tpu_custom_call.1
$region0: #{tpu_custom_call.1}
  #allocation0 [shape = 'u32[]', space=smem, size = 0x4, offset = 0x4, fixed_abs, tag = 'smem constant byte address 0x4 - core index']
  #allocation1 [shape = 'u32[72,128]{1,0:T(1,128)}', space=vmem, size = 0x9000, scoped, tag = 'internal scratch']
  %s0 = inlined_call_operand.hbm [shape: f32[4,512], index: 0, kind: input, shape index: {}]
  %s1 = inlined_call_operand.hbm [shape: f32[4,512], index: 1, kind: output, shape index: {}]
  %s2 = sld [smem:[#allocation0]]
  $region18: #{tpu_custom_call.1} parent=0
    _
  %s4 = ssub.s32 1, %s2
  %s5 = scalar_select 0, %s4, %s2
  $region1: #{tpu_custom_call.1} parent=0
    #allocation2 [shape = 'u8[8192]{0}', space=vmem, size = 0x2000, scoped, tag = 'input window, operand 0, single buffered']
    #allocation3 [shape = 's32[1]{0}', space=sflag, size = 0x4, scoped, tag = 'scoped memory for tpu_custom_call.1']
    #allocation4 [shape = 's32[1]{0}', space=sflag, size = 0x4, scoped, tag = 'scoped memory for tpu_custom_call.1']
    #allocation5 [shape = 'u8[8192]{0}', space=vmem, size = 0x2000, scoped, tag = 'output window, operand 0, single buffered']
    %6 = vsyncpa [#allocation3], 0
    %7 = vsyncpa [#allocation4], 0
    // Predicated region
    $region2: #{tpu_custom_call.1} parent=1 // pred_check
      _
    $region3: #{tpu_custom_call.1} parent=1 // pred_check_branch
      %9 = sbr.rel (0) target = $region5
    $region4: #{tpu_custom_call.1} parent=1 // pred_region
      %11 = vsyncadd [#allocation3], 0
      %s13 = sshll.u32 %s0, 4
      %s14 = int_to_ptr.hbm [resolvable:$true] %s13
      %s15 = sshll.u32 [#allocation2], 4
      %s16 = int_to_ptr.vmem [resolvable:$true] %s15
      %18 = dma.hbm_to_vmem [thread:$0]  %s14, 256, %s16, [#allocation3]
    $region5: #{tpu_custom_call.1} parent=1 // pred_fallthru
      _
    // Predicated region
    $region6: #{tpu_custom_call.1} parent=1 // pred_check
      _
    $region7: #{tpu_custom_call.1} parent=1 // pred_check_branch
      %20 = sbr.rel (0) target = $region9
    $region8: #{tpu_custom_call.1} parent=1 // pred_region
      %22 = dma.done [#allocation3], 256
    $region9: #{tpu_custom_call.1} parent=1 // pred_fallthru
      _
    %v23 = vld [vmem:[#allocation2] sm:$0xff]
    %v24 = vld [vmem:[#allocation2 + $0x8] sm:$0xff]
    %v25 = vadd.f32 %v23, 3.0
    %v26 = vadd.f32 %v24, 3.0
    %v27 = vmax.f32 %v25, 0.0
    %v28 = vmax.f32 %v26, 0.0
    %v29 = vmin.f32 %v27, 6.0
    %v30 = vmin.f32 %v28, 6.0
    %v31 = vmul.f32 %v29, 0.16666667
    %v32 = vmul.f32 %v30, 0.16666667
    %33 = vst [vmem:[#allocation5] sm:$0xff] %v31
    %34 = vst [vmem:[#allocation5 + $0x8] sm:$0xff] %v32
    // Predicated region
    $region10: #{tpu_custom_call.1} parent=1 // pred_check
      _
    $region11: #{tpu_custom_call.1} parent=1 // pred_check_branch
      %36 = sbr.rel (0) target = $region13
    $region12: #{tpu_custom_call.1} parent=1 // pred_region
      %38 = vsyncadd [#allocation4], 0
      %s40 = sshll.u32 [#allocation5], 4
      %s41 = int_to_ptr.vmem [resolvable:$true] %s40
      %s42 = sshll.u32 %s1, 4
      %s43 = int_to_ptr.hbm [resolvable:$true] %s42
      %45 = dma.vmem_to_hbm [thread:$0]  %s41, 256, %s43, [#allocation4]
    $region13: #{tpu_custom_call.1} parent=1 // pred_fallthru
      _
    // Predicated region
    $region14: #{tpu_custom_call.1} parent=1 // pred_check
      _
    $region15: #{tpu_custom_call.1} parent=1 // pred_check_branch
      %47 = sbr.rel (0) target = $region17
    $region16: #{tpu_custom_call.1} parent=1 // pred_region
      %49 = dma.done [#allocation4], 256
    $region17: #{tpu_custom_call.1} parent=1 // pred_fallthru
      _
    %50 = vsyncpa [#allocation3], 1
    %51 = vsyncpa [#allocation4], 1

</llo_original>
